<compile_context>
chip_gen: v6e
topology: v6e:2x2x1
jax: 0.10.0
libtpu: 0.0.40
codegen_flags: <defaults>
</compile_context>

<pallas_src>
import functools

import jax
import jax.numpy as jnp
from jax.experimental import pallas as pl
from jax.experimental.pallas import tpu as pltpu


def _round_up(x: int, m: int) -> int:
    return ((x + m - 1) // m) * m


def kmeans_dist_kernel(x_ref, c_ref, cnorm_ref, o_ref):
    # x_ref:     (TN, D)   feature row tile (native dtype)
    # c_ref:     (k, D)    cluster centers, resident across the grid
    # cnorm_ref: (k, 1)    precomputed ||c||^2 (f32), resident across the grid
    # o_ref:     (k, TN)   squared distances, transposed (lane-dense along TN)
    x = x_ref[...]
    D = x_ref.shape[1]

    # f32 inputs -> full-precision MXU passes (parity with the torch f32 reference);
    # bf16 (etc.) inputs -> native bf16 x bf16 -> f32 MXU path.
    prec = (jax.lax.Precision.HIGHEST if x.dtype == jnp.float32
            else jax.lax.Precision.DEFAULT)

    # Cross term on the MXU: (k, D) x (TN, D)^T -> (k, TN), f32 accumulate.
    cross = jax.lax.dot_general(
        c_ref[...], x, (((1,), (1,)), ((), ())),
        preferred_element_type=jnp.float32, precision=prec)

    # Per-row squared norm as a lane vector: ones(1, D) x (x*x)^T -> (1, TN).
    # Using the (otherwise idle) MXU keeps it lane-dense; no sublane->lane relayout.
    xf = x.astype(jnp.float32)
    xx = xf * xf
    ones_row = jnp.ones((1, D), jnp.float32)
    x_norm = jax.lax.dot_general(
        ones_row, xx, (((1,), (1,)), ((), ())),
        preferred_element_type=jnp.float32,
        precision=jax.lax.Precision.HIGHEST)

    d = cnorm_ref[...] + x_norm - 2.0 * cross            # (k,1) + (1,TN) + (k,TN) -> (k, TN)
    # Clamp tiny negatives from cancellation so semantics match (x - c)^2 >= 0.
    o_ref[...] = jnp.maximum(d, 0.0).astype(o_ref.dtype)


def _choose_tile_n(N, D, k, itemsize, tile_n):
    """Row tile = lane dim of the output block; multiple of 128 unless it spans all of N."""
    if N <= 256:
        return N                                # single block; full-dim block is always legal
    t = _round_up(min(tile_n, N), 128)
    # VMEM budget: double-buffered x + out tiles + f32 temporaries; stay well under v7x's
    # 64 MiB physical VMEM (v5e/v6e have 128 MiB, so this is safe everywhere).
    budget = 24 * 1024 * 1024
    per_row = 2 * D * itemsize + 2 * k * itemsize + 2 * D * 4 + 2 * k * 4
    max_rows = max(128, (budget // per_row) // 128 * 128)
    t = min(t, max_rows)
    # v7x has 2 TensorCores sharing the "parallel" axis: keep >= 2 grid steps, and ~4 steps
    # when tiles can stay >= 512 rows (per-step overhead stays amortized).
    t = min(t, _round_up(pl.cdiv(N, 2), 128))
    if N >= 4 * 512:
        t = min(t, max(512, _round_up(pl.cdiv(N, 4), 128)))
    return max(t, 128)


@functools.partial(jax.jit, static_argnames=("tile_n",))
def kmean_cluster_forward(features, Ck, *, tile_n=2048):
    """features: (B, S, D); Ck: (1, k, D) -> (B, S, k); same semantics as the torch module."""
    B, S, D = features.shape
    k = Ck.shape[1]
    N = B * S
    dt = features.dtype
    itemsize = jnp.dtype(dt).itemsize

    # Free reshape; NO dtype cast and NO padding -> no extra HBM passes over the features.
    x2d = features.reshape(N, D)

    # Tiny (k, D) preprocessing hoisted out of the grid: centers in the feature dtype for the
    # MXU, plus ||c||^2 in f32.
    c = Ck.reshape(k, D).astype(dt)
    cf = c.astype(jnp.float32)
    c_norm = jnp.sum(cf * cf, axis=-1, keepdims=True)     # (k, 1)

    tile_n_eff = _choose_tile_n(N, D, k, itemsize, tile_n)
    grid = (pl.cdiv(N, tile_n_eff),)                      # ragged last tile: OOB output columns
                                                          # are simply dropped by Pallas.

    cost = pl.CostEstimate(
        flops=2 * N * k * D + 2 * N * D,
        transcendentals=0,
        bytes_accessed=itemsize * (N * D + k * D + k * N) + 4 * k)

    out_t = pl.pallas_call(
        kmeans_dist_kernel,
        out_shape=jax.ShapeDtypeStruct((k, N), dt),       # exact shape: no slice afterwards
        grid_spec=pl.GridSpec(
            grid=grid,
            in_specs=[
                pl.BlockSpec((tile_n_eff, D), lambda i: (i, 0)),   # feature row tile
                pl.BlockSpec((k, D), lambda i: (0, 0)),            # centers, resident
                pl.BlockSpec((k, 1), lambda i: (0, 0)),            # ||c||^2, resident
            ],
            out_specs=pl.BlockSpec((k, tile_n_eff), lambda i: (0, i)),
        ),
        compiler_params=pltpu.CompilerParams(
            dimension_semantics=("parallel",),            # row tiles shard across TensorCores
            vmem_limit_bytes=48 * 1024 * 1024,            # <= v7x's 64 MiB; ample on v5e/v6e
        ),
        cost_estimate=cost,
    )(x2d, c, c_norm)

    # Single tiny (k*N element) relayout back to the module's (B, S, k) output.
    return out_t.T.reshape(B, S, k)


if __name__ == "__main__":
    # Small shapes consistent with the module: B=2, S=8, D=32, k=8.
    B, S, D, k = 2, 8, 32, 8
    key = jax.random.PRNGKey(0)
    kf, kc = jax.random.split(key)

    features = jax.random.normal(kf, (B, S, D), dtype=jnp.float32)
    # Deterministic synthetic cluster-center buffer, shape (1, k, D) like the registered buffer.
    Ck = jax.random.normal(kc, (1, k, D), dtype=jnp.float32)

    out = kmean_cluster_forward(features, Ck)
    out = jax.block_until_ready(out)

    # Pure-JAX reference (mirrors the PyTorch broadcasting exactly).
    ref = jnp.sum((features.reshape(B * S, 1, D) - Ck) ** 2, axis=2).reshape(B, S, k)
    assert out.shape == (B, S, k)
    assert out.dtype == features.dtype
    max_err = float(jnp.max(jnp.abs(out - ref)))
    assert jnp.allclose(out, ref, rtol=1e-4, atol=1e-3), max_err

    print("KERNEL_OK")
</pallas_src>

<mosaic_0001>
module attributes {stable_mosaic.version = 11 : i64} {
  func.func @kmeans_dist_kernel(%arg0: i32, %arg1: memref<16x32xf32, #tpu.memory_space<vmem>>, %arg2: memref<8x32xf32, #tpu.memory_space<vmem>>, %arg3: memref<8x1xf32, #tpu.memory_space<vmem>>, %arg4: memref<8x16xf32, #tpu.memory_space<vmem>>) attributes {dimension_semantics = [#tpu.dimension_semantics<parallel>], iteration_bounds = array<i64: 1>, scalar_prefetch = 0 : i64, scratch_operands = 0 : i64, tpu.core_type = #tpu.core_type<tc>, window_params = [{transform_indices = @transform_0, window_bounds = array<i64: 16, 32>}, {pipeline_mode = #tpu.pipeline_mode<synchronous>, transform_indices = @transform_1, window_bounds = array<i64: 8, 32>}, {pipeline_mode = #tpu.pipeline_mode<synchronous>, transform_indices = @transform_2, window_bounds = array<i64: 8, 1>}, {transform_indices = @transform_3, window_bounds = array<i64: 8, 16>}]} {
    %c0 = arith.constant 0 : index
    %c0_0 = arith.constant 0 : index
    %0 = vector.load %arg1[%c0, %c0_0] : memref<16x32xf32, #tpu.memory_space<vmem>>, vector<16x32xf32>
    %c0_1 = arith.constant 0 : index
    %c0_2 = arith.constant 0 : index
    %1 = vector.load %arg2[%c0_1, %c0_2] : memref<8x32xf32, #tpu.memory_space<vmem>>, vector<8x32xf32>
    %cst = arith.constant dense<0.000000e+00> : vector<8x16xf32>
    %2 = tpu.matmul %1, %0, %cst {dimension_numbers = #tpu.dot_dimension_numbers<[1], [1], [0], [0], [0, 0, 1, 0], [], []>, precision = #tpu.contract_precision<fp32>} : vector<8x32xf32>, vector<16x32xf32>, vector<8x16xf32> -> vector<8x16xf32>
    %3 = arith.mulf %0, %0 : vector<16x32xf32>
    %cst_3 = arith.constant 1.000000e+00 : f32
    %4 = vector.broadcast %cst_3 : f32 to vector<1x32xf32>
    %cst_4 = arith.constant dense<0.000000e+00> : vector<1x16xf32>
    %5 = tpu.matmul %4, %3, %cst_4 {dimension_numbers = #tpu.dot_dimension_numbers<[1], [1], [0], [0], [0, 0, 1, 0], [], []>, precision = #tpu.contract_precision<fp32>} : vector<1x32xf32>, vector<16x32xf32>, vector<1x16xf32> -> vector<1x16xf32>
    %c0_5 = arith.constant 0 : index
    %c0_6 = arith.constant 0 : index
    %6 = vector.load %arg3[%c0_5, %c0_6] : memref<8x1xf32, #tpu.memory_space<vmem>>, vector<8x1xf32>
    %7 = vector.broadcast %6 : vector<8x1xf32> to vector<8x16xf32>
    %8 = vector.broadcast %5 : vector<1x16xf32> to vector<8x16xf32>
    %9 = arith.addf %7, %8 : vector<8x16xf32>
    %cst_7 = arith.constant 2.000000e+00 : f32
    %10 = vector.broadcast %cst_7 : f32 to vector<8x16xf32>
    %11 = arith.mulf %10, %2 : vector<8x16xf32>
    %12 = arith.subf %9, %11 : vector<8x16xf32>
    %cst_8 = arith.constant 0.000000e+00 : f32
    %13 = vector.broadcast %cst_8 : f32 to vector<8x16xf32>
    %14 = arith.maximumf %12, %13 : vector<8x16xf32>
    %c0_9 = arith.constant 0 : index
    %c0_10 = arith.constant 0 : index
    %15 = vector.load %arg4[%c0_9, %c0_10] : memref<8x16xf32, #tpu.memory_space<vmem>>, vector<8x16xf32>
    tpu.vector_store %arg4[%c0_9, %c0_10], %14 {strides = array<i32>} : memref<8x16xf32, #tpu.memory_space<vmem>>, vector<8x16xf32>,
    return
  }
  func.func @transform_0(%arg0: i32) -> (i32, i32) {
    %c0_i32 = arith.constant 0 : i32
    %c0_i32_0 = arith.constant 0 : i32
    return %arg0, %c0_i32 : i32, i32
  }
  func.func @transform_1(%arg0: i32) -> (i32, i32) {
    %c0_i32 = arith.constant 0 : i32
    %c0_i32_0 = arith.constant 0 : i32
    %c0_i32_1 = arith.constant 0 : i32
    return %c0_i32, %c0_i32_0 : i32, i32
  }
  func.func @transform_2(%arg0: i32) -> (i32, i32) {
    %c0_i32 = arith.constant 0 : i32
    %c0_i32_0 = arith.constant 0 : i32
    %c0_i32_1 = arith.constant 0 : i32
    return %c0_i32, %c0_i32_0 : i32, i32
  }
  func.func @transform_3(%arg0: i32) -> (i32, i32) {
    %c0_i32 = arith.constant 0 : i32
    %c0_i32_0 = arith.constant 0 : i32
    return %c0_i32, %arg0 : i32, i32
  }
}

</mosaic_0001>

<llo_original>
// kernel: kmean_cluster_forward.1
$region0: #{kmean_cluster_forward.1}
  #allocation0 [shape = 'u32[]', space=smem, size = 0x4, offset = 0x4, fixed_abs, tag = 'smem constant byte address 0x4 - core index']
  #allocation1 [shape = 'u32[144,128]{1,0:T(1,128)}', space=vmem, size = 0x12000, scoped, tag = 'internal scratch']
  %s0 = inlined_call_operand.hbm [shape: f32[16,32], index: 0, kind: input, shape index: {}]
  %s1 = inlined_call_operand.vmem [shape: f32[8,32], index: 1, kind: input, shape index: {}]
  %s2 = inlined_call_operand.vmem [shape: f32[8,1], index: 2, kind: input, shape index: {}]
  %s3 = inlined_call_operand.vmem [shape: f32[8,16], index: 3, kind: output, shape index: {}]
  %s4 = sld [smem:[#allocation0]]
  $region26: #{kmean_cluster_forward.1} parent=0
    _
  %s6 = ssub.s32 1, %s4
  %s7 = scalar_select 0, %s6, %s4
  $region1: #{kmean_cluster_forward.1} parent=0
    #allocation2 [shape = 'u8[8192]{0}', space=vmem, size = 0x2000, scoped, tag = 'input window, operand 0, single buffered']
    #allocation3 [shape = 's32[1]{0}', space=sflag, size = 0x4, scoped, tag = 'scoped memory for kmean_cluster_forward.1']
    %8 = vsyncpa [#allocation3], 0
    // Predicated region
    $region2: #{kmean_cluster_forward.1} parent=1 // pred_check
      _
    $region3: #{kmean_cluster_forward.1} parent=1 // pred_check_branch
      %10 = sbr.rel (0) target = $region5
    $region4: #{kmean_cluster_forward.1} parent=1 // pred_region
      %s12 = ssub.s32 256, 256
      %13 = vsyncadd [#allocation3], %s12
      %s14 = sshll.u32 [#allocation2], 4
      %s15 = int_to_ptr.vmem [resolvable:$true] %s14
      %20 = dma.hbm_to_vmem [thread:$0]  %s0, 256, %s15, [#allocation3], 128, 128, 8
    $region5: #{kmean_cluster_forward.1} parent=1 // pred_fallthru
      _
    // Predicated region
    $region6: #{kmean_cluster_forward.1} parent=1 // pred_check
      _
    $region7: #{kmean_cluster_forward.1} parent=1 // pred_check_branch
      %22 = sbr.rel (0) target = $region9
    $region8: #{kmean_cluster_forward.1} parent=1 // pred_region
      _
    $region9: #{kmean_cluster_forward.1} parent=1 // pred_fallthru
      _
    // Predicated region
    $region10: #{kmean_cluster_forward.1} parent=1 // pred_check
      _
    $region11: #{kmean_cluster_forward.1} parent=1 // pred_check_branch
      %24 = sbr.rel (0) target = $region13
    $region12: #{kmean_cluster_forward.1} parent=1 // pred_region
      _
    $region13: #{kmean_cluster_forward.1} parent=1 // pred_fallthru
      _
    // Predicated region
    $region14: #{kmean_cluster_forward.1} parent=1 // pred_check
      _
    $region15: #{kmean_cluster_forward.1} parent=1 // pred_check_branch
      %26 = sbr.rel (0) target = $region17
    $region16: #{kmean_cluster_forward.1} parent=1 // pred_region
      %27 = dma.done [#allocation3], 256
    $region17: #{kmean_cluster_forward.1} parent=1 // pred_fallthru
      _
    %v28 = vld [vmem:[#allocation2] sm:$0xff]
    %v29 = vld [vmem:[#allocation2 + $0x8] sm:$0xff]
    %v30 = vld [vmem:[%s1] sm:$0xff]
    %vm31 = vcmask 261120
    %v33 = vsel %vm31, %v30, 0
    %v36 = vsel %vm31, %v28, 0
    %v39 = vsel %vm31, %v29, 0
    %41 = vmatprep.subr.mxu0 0.0
    %42 = vmatpush1.xpose.msra.mxu0 0.0
    %43 = vmatprep.subr.mxu0 0.0
    %44 = vmatpush1.xpose.msra.mxu0 0.0
    %45 = vmatprep.subr.mxu0 0.0
    %46 = vmatpush1.xpose.msra.mxu0 0.0
    %47 = vmatprep.subr.mxu0 0.0
    %48 = vmatpush1.xpose.msra.mxu0 0.0
    %49 = vmatprep.subr.mxu0 0.0
    %50 = vmatpush1.xpose.msra.mxu0 0.0
    %51 = vmatprep.subr.mxu0 0.0
    %52 = vmatpush1.xpose.msra.mxu0 0.0
    %53 = vmatprep.subr.mxu0 0.0
    %54 = vmatpush1.xpose.msra.mxu0 0.0
    %55 = vmatprep.subr.mxu0 0.0
    %56 = vmatpush1.xpose.msra.mxu0 0.0
    %57 = vmatprep.subr.mxu0 0.0
    %58 = vmatpush1.xpose.msra.mxu0 0.0
    %59 = vmatprep.subr.mxu0 0.0
    %60 = vmatpush1.xpose.msra.mxu0 0.0
    %61 = vmatprep.subr.mxu0 0.0
    %62 = vmatpush1.xpose.msra.mxu0 0.0
    %63 = vmatprep.subr.mxu0 0.0
    %64 = vmatpush1.xpose.msra.mxu0 0.0
    %65 = vmatprep.subr.mxu0 0.0
    %66 = vmatpush1.xpose.msra.mxu0 0.0
    %67 = vmatprep.subr.mxu0 0.0
    %68 = vmatpush1.xpose.msra.mxu0 0.0
    %69 = vmatprep.subr.mxu0 0.0
    %v70 = vand.u32 %v39, 4294901760
    %71 = vmatpush1.xpose.msra.mxu0 %v70
    %72 = vmatprep.subr.mxu0 0.0
    %v73 = vand.u32 %v36, 4294901760
    %74 = vmatpush1.xpose.msra.mxu0 %v73
    %75 = vmatprep.subr.mxu0 0.0
    %76 = vmatpush2.xpose.msra.mxu0 0.0
    %77 = vmatprep.subr.mxu0 0.0
    %78 = vmatpush2.xpose.msra.mxu0 0.0
    %79 = vmatprep.subr.mxu0 0.0
    %80 = vmatpush2.xpose.msra.mxu0 0.0
    %81 = vmatprep.subr.mxu0 0.0
    %82 = vmatpush2.xpose.msra.mxu0 0.0
    %83 = vmatprep.subr.mxu0 0.0
    %84 = vmatpush2.xpose.msra.mxu0 0.0
    %85 = vmatprep.subr.mxu0 0.0
    %86 = vmatpush2.xpose.msra.mxu0 0.0
    %87 = vmatprep.subr.mxu0 0.0
    %88 = vmatpush2.xpose.msra.mxu0 0.0
    %89 = vmatprep.subr.mxu0 0.0
    %90 = vmatpush2.xpose.msra.mxu0 0.0
    %91 = vmatprep.subr.mxu0 0.0
    %92 = vmatpush2.xpose.msra.mxu0 0.0
    %93 = vmatprep.subr.mxu0 0.0
    %94 = vmatpush2.xpose.msra.mxu0 0.0
    %95 = vmatprep.subr.mxu0 0.0
    %96 = vmatpush2.xpose.msra.mxu0 0.0
    %97 = vmatprep.subr.mxu0 0.0
    %98 = vmatpush2.xpose.msra.mxu0 0.0
    %99 = vmatprep.subr.mxu0 0.0
    %100 = vmatpush2.xpose.msra.mxu0 0.0
    %101 = vmatprep.subr.mxu0 0.0
    %102 = vmatpush2.xpose.msra.mxu0 0.0
    %103 = vmatprep.subr.mxu0 0.0
    %104 = vmatpush2.xpose.msra.mxu0 0.0
    %105 = vmatprep.subr.mxu0 0.0
    %106 = vmatpush2.xpose.msra.mxu0 0.0
    %107 = vmatprep.mubr.f32.mxu0 0.0
    %v108 = vand.u32 %v33, 4294901760
    %v109 = vsub.f32 %v33, %v108
    %v110 = vand.u32 %v109, 4294901760
    %v111 = vsub.f32 %v109, %v110
    %v112 = vand.u32 %v111, 4294901760
    %113 = vmatmul.mubr.f32.gmra.mxu0 %v112
    %v114 = vpop.f32.mrf.mxu0
    %v115 = vadd.f32 0.0, %v114
    %v116 = vpop.f32.mrf.mxu0
    %117 = vdwg.mxu0
    %118 = vmatprep.subr.mxu0 0.0
    %119 = vmatpush1.xpose.msra.mxu0 0.0
    %120 = vmatprep.subr.mxu0 0.0
    %121 = vmatpush1.xpose.msra.mxu0 0.0
    %122 = vmatprep.subr.mxu0 0.0
    %123 = vmatpush1.xpose.msra.mxu0 0.0
    %124 = vmatprep.subr.mxu0 0.0
    %125 = vmatpush1.xpose.msra.mxu0 0.0
    %126 = vmatprep.subr.mxu0 0.0
    %127 = vmatpush1.xpose.msra.mxu0 0.0
    %128 = vmatprep.subr.mxu0 0.0
    %129 = vmatpush1.xpose.msra.mxu0 0.0
    %130 = vmatprep.subr.mxu0 0.0
    %131 = vmatpush1.xpose.msra.mxu0 0.0
    %132 = vmatprep.subr.mxu0 0.0
    %133 = vmatpush1.xpose.msra.mxu0 0.0
    %134 = vmatprep.subr.mxu0 0.0
    %135 = vmatpush1.xpose.msra.mxu0 0.0
    %136 = vmatprep.subr.mxu0 0.0
    %137 = vmatpush1.xpose.msra.mxu0 0.0
    %138 = vmatprep.subr.mxu0 0.0
    %139 = vmatpush1.xpose.msra.mxu0 0.0
    %140 = vmatprep.subr.mxu0 0.0
    %141 = vmatpush1.xpose.msra.mxu0 0.0
    %142 = vmatprep.subr.mxu0 0.0
    %143 = vmatpush1.xpose.msra.mxu0 0.0
    %144 = vmatprep.subr.mxu0 0.0
    %145 = vmatpush1.xpose.msra.mxu0 0.0
    %146 = vmatprep.subr.mxu0 0.0
    %v147 = vand.u32 %v39, 4294901760
    %v148 = vsub.f32 %v39, %v147
    %v149 = vand.u32 %v148, 4294901760
    %v150 = vsub.f32 %v148, %v149
    %v151 = vand.u32 %v150, 4294901760
    %152 = vmatpush1.xpose.msra.mxu0 %v151
    %153 = vmatprep.subr.mxu0 0.0
    %v154 = vand.u32 %v36, 4294901760
    %v155 = vsub.f32 %v36, %v154
    %v156 = vand.u32 %v155, 4294901760
    %v157 = vsub.f32 %v155, %v156
    %v158 = vand.u32 %v157, 4294901760
    %159 = vmatpush1.xpose.msra.mxu0 %v158
    %160 = vmatprep.subr.mxu0 0.0
    %161 = vmatpush2.xpose.msra.mxu0 0.0
    %162 = vmatprep.subr.mxu0 0.0
    %163 = vmatpush2.xpose.msra.mxu0 0.0
    %164 = vmatprep.subr.mxu0 0.0
    %165 = vmatpush2.xpose.msra.mxu0 0.0
    %166 = vmatprep.subr.mxu0 0.0
    %167 = vmatpush2.xpose.msra.mxu0 0.0
    %168 = vmatprep.subr.mxu0 0.0
    %169 = vmatpush2.xpose.msra.mxu0 0.0
    %170 = vmatprep.subr.mxu0 0.0
    %171 = vmatpush2.xpose.msra.mxu0 0.0
    %172 = vmatprep.subr.mxu0 0.0
    %173 = vmatpush2.xpose.msra.mxu0 0.0
    %174 = vmatprep.subr.mxu0 0.0
    %175 = vmatpush2.xpose.msra.mxu0 0.0
    %176 = vmatprep.subr.mxu0 0.0
    %177 = vmatpush2.xpose.msra.mxu0 0.0
    %178 = vmatprep.subr.mxu0 0.0
    %179 = vmatpush2.xpose.msra.mxu0 0.0
    %180 = vmatprep.subr.mxu0 0.0
    %181 = vmatpush2.xpose.msra.mxu0 0.0
    %182 = vmatprep.subr.mxu0 0.0
    %183 = vmatpush2.xpose.msra.mxu0 0.0
    %184 = vmatprep.subr.mxu0 0.0
    %185 = vmatpush2.xpose.msra.mxu0 0.0
    %186 = vmatprep.subr.mxu0 0.0
    %187 = vmatpush2.xpose.msra.mxu0 0.0
    %188 = vmatprep.subr.mxu0 0.0
    %189 = vmatpush2.xpose.msra.mxu0 0.0
    %190 = vmatprep.subr.mxu0 0.0
    %191 = vmatpush2.xpose.msra.mxu0 0.0
    %192 = vmatprep.mubr.f32.mxu0 0.0
    %v193 = vand.u32 %v33, 4294901760
    %194 = vmatmul.mubr.f32.gmra.mxu0 %v193
    %v195 = vpop.f32.mrf.mxu0
    %v196 = vadd.f32 %v115, %v195
    %v197 = vpop.f32.mrf.mxu0
    %198 = vdwg.mxu0
    %199 = vmatprep.subr.mxu0 0.0
    %200 = vmatpush1.xpose.msra.mxu0 0.0
    %201 = vmatprep.subr.mxu0 0.0
    %202 = vmatpush1.xpose.msra.mxu0 0.0
    %203 = vmatprep.subr.mxu0 0.0
    %204 = vmatpush1.xpose.msra.mxu0 0.0
    %205 = vmatprep.subr.mxu0 0.0
    %206 = vmatpush1.xpose.msra.mxu0 0.0
    %207 = vmatprep.subr.mxu0 0.0
    %208 = vmatpush1.xpose.msra.mxu0 0.0
    %209 = vmatprep.subr.mxu0 0.0
    %210 = vmatpush1.xpose.msra.mxu0 0.0
    %211 = vmatprep.subr.mxu0 0.0
    %212 = vmatpush1.xpose.msra.mxu0 0.0
    %213 = vmatprep.subr.mxu0 0.0
    %214 = vmatpush1.xpose.msra.mxu0 0.0
    %215 = vmatprep.subr.mxu0 0.0
    %216 = vmatpush1.xpose.msra.mxu0 0.0
    %217 = vmatprep.subr.mxu0 0.0
    %218 = vmatpush1.xpose.msra.mxu0 0.0
    %219 = vmatprep.subr.mxu0 0.0
    %220 = vmatpush1.xpose.msra.mxu0 0.0
    %221 = vmatprep.subr.mxu0 0.0
    %222 = vmatpush1.xpose.msra.mxu0 0.0
    %223 = vmatprep.subr.mxu0 0.0
    %224 = vmatpush1.xpose.msra.mxu0 0.0
    %225 = vmatprep.subr.mxu0 0.0
    %226 = vmatpush1.xpose.msra.mxu0 0.0
    %227 = vmatprep.subr.mxu0 0.0
    %v228 = vand.u32 %v39, 4294901760
    %v229 = vsub.f32 %v39, %v228
    %230 = vmatpush1.xpose.msra.mxu0 %v229
    %231 = vmatprep.subr.mxu0 0.0
    %v232 = vand.u32 %v36, 4294901760
    %v233 = vsub.f32 %v36, %v232
    %234 = vmatpush1.xpose.msra.mxu0 %v233
    %235 = vmatprep.subr.mxu0 0.0
    %236 = vmatpush2.xpose.msra.mxu0 0.0
    %237 = vmatprep.subr.mxu0 0.0
    %238 = vmatpush2.xpose.msra.mxu0 0.0
    %239 = vmatprep.subr.mxu0 0.0
    %240 = vmatpush2.xpose.msra.mxu0 0.0
    %241 = vmatprep.subr.mxu0 0.0
    %242 = vmatpush2.xpose.msra.mxu0 0.0
    %243 = vmatprep.subr.mxu0 0.0
    %244 = vmatpush2.xpose.msra.mxu0 0.0
    %245 = vmatprep.subr.mxu0 0.0
    %246 = vmatpush2.xpose.msra.mxu0 0.0
    %247 = vmatprep.subr.mxu0 0.0
    %248 = vmatpush2.xpose.msra.mxu0 0.0
    %249 = vmatprep.subr.mxu0 0.0
    %250 = vmatpush2.xpose.msra.mxu0 0.0
    %251 = vmatprep.subr.mxu0 0.0
    %252 = vmatpush2.xpose.msra.mxu0 0.0
    %253 = vmatprep.subr.mxu0 0.0
    %254 = vmatpush2.xpose.msra.mxu0 0.0
    %255 = vmatprep.subr.mxu0 0.0
    %256 = vmatpush2.xpose.msra.mxu0 0.0
    %257 = vmatprep.subr.mxu0 0.0
    %258 = vmatpush2.xpose.msra.mxu0 0.0
    %259 = vmatprep.subr.mxu0 0.0
    %260 = vmatpush2.xpose.msra.mxu0 0.0
    %261 = vmatprep.subr.mxu0 0.0
    %262 = vmatpush2.xpose.msra.mxu0 0.0
    %263 = vmatprep.subr.mxu0 0.0
    %264 = vmatpush2.xpose.msra.mxu0 0.0
    %265 = vmatprep.subr.mxu0 0.0
    %266 = vmatpush2.xpose.msra.mxu0 0.0
    %267 = vmatprep.mubr.f32.mxu0 0.0
    %v268 = vand.u32 %v33, 4294901760
    %v269 = vsub.f32 %v33, %v268
    %270 = vmatmul.mubr.f32.gmra.mxu0 %v269
    %v271 = vpop.f32.mrf.mxu0
    %v272 = vadd.f32 %v196, %v271
    %v273 = vpop.f32.mrf.mxu0
    %274 = vdwg.mxu0
    %275 = vmatprep.subr.mxu0 0.0
    %276 = vmatpush1.xpose.msra.mxu0 0.0
    %277 = vmatprep.subr.mxu0 0.0
    %278 = vmatpush1.xpose.msra.mxu0 0.0
    %279 = vmatprep.subr.mxu0 0.0
    %280 = vmatpush1.xpose.msra.mxu0 0.0
    %281 = vmatprep.subr.mxu0 0.0
    %282 = vmatpush1.xpose.msra.mxu0 0.0
    %283 = vmatprep.subr.mxu0 0.0
    %284 = vmatpush1.xpose.msra.mxu0 0.0
    %285 = vmatprep.subr.mxu0 0.0
    %286 = vmatpush1.xpose.msra.mxu0 0.0
    %287 = vmatprep.subr.mxu0 0.0
    %288 = vmatpush1.xpose.msra.mxu0 0.0
    %289 = vmatprep.subr.mxu0 0.0
    %290 = vmatpush1.xpose.msra.mxu0 0.0
    %291 = vmatprep.subr.mxu0 0.0
    %292 = vmatpush1.xpose.msra.mxu0 0.0
    %293 = vmatprep.subr.mxu0 0.0
    %294 = vmatpush1.xpose.msra.mxu0 0.0
    %295 = vmatprep.subr.mxu0 0.0
    %296 = vmatpush1.xpose.msra.mxu0 0.0
    %297 = vmatprep.subr.mxu0 0.0
    %298 = vmatpush1.xpose.msra.mxu0 0.0
    %299 = vmatprep.subr.mxu0 0.0
    %300 = vmatpush1.xpose.msra.mxu0 0.0
    %301 = vmatprep.subr.mxu0 0.0
    %302 = vmatpush1.xpose.msra.mxu0 0.0
    %303 = vmatprep.subr.mxu0 0.0
    %v304 = vand.u32 %v39, 4294901760
    %305 = vmatpush1.xpose.msra.mxu0 %v304
    %306 = vmatprep.subr.mxu0 0.0
    %v307 = vand.u32 %v36, 4294901760
    %308 = vmatpush1.xpose.msra.mxu0 %v307
    %309 = vmatprep.subr.mxu0 0.0
    %310 = vmatpush2.xpose.msra.mxu0 0.0
    %311 = vmatprep.subr.mxu0 0.0
    %312 = vmatpush2.xpose.msra.mxu0 0.0
    %313 = vmatprep.subr.mxu0 0.0
    %314 = vmatpush2.xpose.msra.mxu0 0.0
    %315 = vmatprep.subr.mxu0 0.0
    %316 = vmatpush2.xpose.msra.mxu0 0.0
    %317 = vmatprep.subr.mxu0 0.0
    %318 = vmatpush2.xpose.msra.mxu0 0.0
    %319 = vmatprep.subr.mxu0 0.0
    %320 = vmatpush2.xpose.msra.mxu0 0.0
    %321 = vmatprep.subr.mxu0 0.0
    %322 = vmatpush2.xpose.msra.mxu0 0.0
    %323 = vmatprep.subr.mxu0 0.0
    %324 = vmatpush2.xpose.msra.mxu0 0.0
    %325 = vmatprep.subr.mxu0 0.0
    %326 = vmatpush2.xpose.msra.mxu0 0.0
    %327 = vmatprep.subr.mxu0 0.0
    %328 = vmatpush2.xpose.msra.mxu0 0.0
    %329 = vmatprep.subr.mxu0 0.0
    %330 = vmatpush2.xpose.msra.mxu0 0.0
    %331 = vmatprep.subr.mxu0 0.0
    %332 = vmatpush2.xpose.msra.mxu0 0.0
    %333 = vmatprep.subr.mxu0 0.0
    %334 = vmatpush2.xpose.msra.mxu0 0.0
    %335 = vmatprep.subr.mxu0 0.0
    %336 = vmatpush2.xpose.msra.mxu0 0.0
    %337 = vmatprep.subr.mxu0 0.0
    %338 = vmatpush2.xpose.msra.mxu0 0.0
    %339 = vmatprep.subr.mxu0 0.0
    %340 = vmatpush2.xpose.msra.mxu0 0.0
    %341 = vmatprep.mubr.f32.mxu0 0.0
    %v342 = vand.u32 %v33, 4294901760
    %v343 = vsub.f32 %v33, %v342
    %v344 = vand.u32 %v343, 4294901760
    %345 = vmatmul.mubr.f32.gmra.mxu0 %v344
    %v346 = vpop.f32.mrf.mxu0
    %v347 = vadd.f32 %v272, %v346
    %v348 = vpop.f32.mrf.mxu0
    %349 = vdwg.mxu0
    %350 = vmatprep.subr.mxu0 0.0
    %351 = vmatpush1.xpose.msra.mxu0 0.0
    %352 = vmatprep.subr.mxu0 0.0
    %353 = vmatpush1.xpose.msra.mxu0 0.0
    %354 = vmatprep.subr.mxu0 0.0
    %355 = vmatpush1.xpose.msra.mxu0 0.0
    %356 = vmatprep.subr.mxu0 0.0
    %357 = vmatpush1.xpose.msra.mxu0 0.0
    %358 = vmatprep.subr.mxu0 0.0
    %359 = vmatpush1.xpose.msra.mxu0 0.0
    %360 = vmatprep.subr.mxu0 0.0
    %361 = vmatpush1.xpose.msra.mxu0 0.0
    %362 = vmatprep.subr.mxu0 0.0
    %363 = vmatpush1.xpose.msra.mxu0 0.0
    %364 = vmatprep.subr.mxu0 0.0
    %365 = vmatpush1.xpose.msra.mxu0 0.0
    %366 = vmatprep.subr.mxu0 0.0
    %367 = vmatpush1.xpose.msra.mxu0 0.0
    %368 = vmatprep.subr.mxu0 0.0
    %369 = vmatpush1.xpose.msra.mxu0 0.0
    %370 = vmatprep.subr.mxu0 0.0
    %371 = vmatpush1.xpose.msra.mxu0 0.0
    %372 = vmatprep.subr.mxu0 0.0
    %373 = vmatpush1.xpose.msra.mxu0 0.0
    %374 = vmatprep.subr.mxu0 0.0
    %375 = vmatpush1.xpose.msra.mxu0 0.0
    %376 = vmatprep.subr.mxu0 0.0
    %377 = vmatpush1.xpose.msra.mxu0 0.0
    %378 = vmatprep.subr.mxu0 0.0
    %v379 = vand.u32 %v39, 4294901760
    %v380 = vsub.f32 %v39, %v379
    %v381 = vand.u32 %v380, 4294901760
    %382 = vmatpush1.xpose.msra.mxu0 %v381
    %383 = vmatprep.subr.mxu0 0.0
    %v384 = vand.u32 %v36, 4294901760
    %v385 = vsub.f32 %v36, %v384
    %v386 = vand.u32 %v385, 4294901760
    %387 = vmatpush1.xpose.msra.mxu0 %v386
    %388 = vmatprep.subr.mxu0 0.0
    %389 = vmatpush2.xpose.msra.mxu0 0.0
    %390 = vmatprep.subr.mxu0 0.0
    %391 = vmatpush2.xpose.msra.mxu0 0.0
    %392 = vmatprep.subr.mxu0 0.0
    %393 = vmatpush2.xpose.msra.mxu0 0.0
    %394 = vmatprep.subr.mxu0 0.0
    %395 = vmatpush2.xpose.msra.mxu0 0.0
    %396 = vmatprep.subr.mxu0 0.0
    %397 = vmatpush2.xpose.msra.mxu0 0.0
    %398 = vmatprep.subr.mxu0 0.0
    %399 = vmatpush2.xpose.msra.mxu0 0.0
    %400 = vmatprep.subr.mxu0 0.0
    %401 = vmatpush2.xpose.msra.mxu0 0.0
    %402 = vmatprep.subr.mxu0 0.0
    %403 = vmatpush2.xpose.msra.mxu0 0.0
    %404 = vmatprep.subr.mxu0 0.0
    %405 = vmatpush2.xpose.msra.mxu0 0.0
    %406 = vmatprep.subr.mxu0 0.0
    %407 = vmatpush2.xpose.msra.mxu0 0.0
    %408 = vmatprep.subr.mxu0 0.0
    %409 = vmatpush2.xpose.msra.mxu0 0.0
    %410 = vmatprep.subr.mxu0 0.0
    %411 = vmatpush2.xpose.msra.mxu0 0.0
    %412 = vmatprep.subr.mxu0 0.0
    %413 = vmatpush2.xpose.msra.mxu0 0.0
    %414 = vmatprep.subr.mxu0 0.0
    %415 = vmatpush2.xpose.msra.mxu0 0.0
    %416 = vmatprep.subr.mxu0 0.0
    %417 = vmatpush2.xpose.msra.mxu0 0.0
    %418 = vmatprep.subr.mxu0 0.0
    %419 = vmatpush2.xpose.msra.mxu0 0.0
    %420 = vmatprep.mubr.f32.mxu0 0.0
    %v421 = vand.u32 %v33, 4294901760
    %422 = vmatmul.mubr.f32.gmra.mxu0 %v421
    %v423 = vpop.f32.mrf.mxu0
    %v424 = vadd.f32 %v347, %v423
    %v425 = vpop.f32.mrf.mxu0
    %426 = vdwg.mxu0
    %427 = vmatprep.subr.mxu0 0.0
    %428 = vmatpush1.xpose.msra.mxu0 0.0
    %429 = vmatprep.subr.mxu0 0.0
    %430 = vmatpush1.xpose.msra.mxu0 0.0
    %431 = vmatprep.subr.mxu0 0.0
    %432 = vmatpush1.xpose.msra.mxu0 0.0
    %433 = vmatprep.subr.mxu0 0.0
    %434 = vmatpush1.xpose.msra.mxu0 0.0
    %435 = vmatprep.subr.mxu0 0.0
    %436 = vmatpush1.xpose.msra.mxu0 0.0
    %437 = vmatprep.subr.mxu0 0.0
    %438 = vmatpush1.xpose.msra.mxu0 0.0
    %439 = vmatprep.subr.mxu0 0.0
    %440 = vmatpush1.xpose.msra.mxu0 0.0
    %441 = vmatprep.subr.mxu0 0.0
    %442 = vmatpush1.xpose.msra.mxu0 0.0
    %443 = vmatprep.subr.mxu0 0.0
    %444 = vmatpush1.xpose.msra.mxu0 0.0
    %445 = vmatprep.subr.mxu0 0.0
    %446 = vmatpush1.xpose.msra.mxu0 0.0
    %447 = vmatprep.subr.mxu0 0.0
    %448 = vmatpush1.xpose.msra.mxu0 0.0
    %449 = vmatprep.subr.mxu0 0.0
    %450 = vmatpush1.xpose.msra.mxu0 0.0
    %451 = vmatprep.subr.mxu0 0.0
    %452 = vmatpush1.xpose.msra.mxu0 0.0
    %453 = vmatprep.subr.mxu0 0.0
    %454 = vmatpush1.xpose.msra.mxu0 0.0
    %455 = vmatprep.subr.mxu0 0.0
    %v456 = vand.u32 %v39, 4294901760
    %457 = vmatpush1.xpose.msra.mxu0 %v456
    %458 = vmatprep.subr.mxu0 0.0
    %v459 = vand.u32 %v36, 4294901760
    %460 = vmatpush1.xpose.msra.mxu0 %v459
    %461 = vmatprep.subr.mxu0 0.0
    %462 = vmatpush2.xpose.msra.mxu0 0.0
    %463 = vmatprep.subr.mxu0 0.0
    %464 = vmatpush2.xpose.msra.mxu0 0.0
    %465 = vmatprep.subr.mxu0 0.0
    %466 = vmatpush2.xpose.msra.mxu0 0.0
    %467 = vmatprep.subr.mxu0 0.0
    %468 = vmatpush2.xpose.msra.mxu0 0.0
    %469 = vmatprep.subr.mxu0 0.0
    %470 = vmatpush2.xpose.msra.mxu0 0.0
    %471 = vmatprep.subr.mxu0 0.0
    %472 = vmatpush2.xpose.msra.mxu0 0.0
    %473 = vmatprep.subr.mxu0 0.0
    %474 = vmatpush2.xpose.msra.mxu0 0.0
    %475 = vmatprep.subr.mxu0 0.0
    %476 = vmatpush2.xpose.msra.mxu0 0.0
    %477 = vmatprep.subr.mxu0 0.0
    %478 = vmatpush2.xpose.msra.mxu0 0.0
    %479 = vmatprep.subr.mxu0 0.0
    %480 = vmatpush2.xpose.msra.mxu0 0.0
    %481 = vmatprep.subr.mxu0 0.0
    %482 = vmatpush2.xpose.msra.mxu0 0.0
    %483 = vmatprep.subr.mxu0 0.0
    %484 = vmatpush2.xpose.msra.mxu0 0.0
    %485 = vmatprep.subr.mxu0 0.0
    %486 = vmatpush2.xpose.msra.mxu0 0.0
    %487 = vmatprep.subr.mxu0 0.0
    %488 = vmatpush2.xpose.msra.mxu0 0.0
    %489 = vmatprep.subr.mxu0 0.0
    %490 = vmatpush2.xpose.msra.mxu0 0.0
    %491 = vmatprep.subr.mxu0 0.0
    %492 = vmatpush2.xpose.msra.mxu0 0.0
    %493 = vmatprep.mubr.f32.mxu0 0.0
    %v494 = vand.u32 %v33, 4294901760
    %495 = vmatmul.mubr.f32.gmra.mxu0 %v494
    %v496 = vpop.f32.mrf.mxu0
    %v497 = vadd.f32 %v424, %v496
    %v498 = vpop.f32.mrf.mxu0
    %499 = vdwg.mxu0
    %v500 = vmul.f32 %v28, %v28
    %v501 = vmul.f32 %v29, %v29
    %v503 = vsel %vm31, 1.0, 0
    %v506 = vsel %vm31, %v500, 0
    %v509 = vsel %vm31, %v501, 0
    %511 = vmatprep.subr.mxu0 0.0
    %512 = vmatpush1.xpose.msra.mxu0 0.0
    %513 = vmatprep.subr.mxu0 0.0
    %514 = vmatpush1.xpose.msra.mxu0 0.0
    %515 = vmatprep.subr.mxu0 0.0
    %516 = vmatpush1.xpose.msra.mxu0 0.0
    %517 = vmatprep.subr.mxu0 0.0
    %518 = vmatpush1.xpose.msra.mxu0 0.0
    %519 = vmatprep.subr.mxu0 0.0
    %520 = vmatpush1.xpose.msra.mxu0 0.0
    %521 = vmatprep.subr.mxu0 0.0
    %522 = vmatpush1.xpose.msra.mxu0 0.0
    %523 = vmatprep.subr.mxu0 0.0
    %524 = vmatpush1.xpose.msra.mxu0 0.0
    %525 = vmatprep.subr.mxu0 0.0
    %526 = vmatpush1.xpose.msra.mxu0 0.0
    %527 = vmatprep.subr.mxu0 0.0
    %528 = vmatpush1.xpose.msra.mxu0 0.0
    %529 = vmatprep.subr.mxu0 0.0
    %530 = vmatpush1.xpose.msra.mxu0 0.0
    %531 = vmatprep.subr.mxu0 0.0
    %532 = vmatpush1.xpose.msra.mxu0 0.0
    %533 = vmatprep.subr.mxu0 0.0
    %534 = vmatpush1.xpose.msra.mxu0 0.0
    %535 = vmatprep.subr.mxu0 0.0
    %536 = vmatpush1.xpose.msra.mxu0 0.0
    %537 = vmatprep.subr.mxu0 0.0
    %538 = vmatpush1.xpose.msra.mxu0 0.0
    %539 = vmatprep.subr.mxu0 0.0
    %v540 = vand.u32 %v509, 4294901760
    %541 = vmatpush1.xpose.msra.mxu0 %v540
    %542 = vmatprep.subr.mxu0 0.0
    %v543 = vand.u32 %v506, 4294901760
    %544 = vmatpush1.xpose.msra.mxu0 %v543
    %545 = vmatprep.subr.mxu0 0.0
    %546 = vmatpush2.xpose.msra.mxu0 0.0
    %547 = vmatprep.subr.mxu0 0.0
    %548 = vmatpush2.xpose.msra.mxu0 0.0
    %549 = vmatprep.subr.mxu0 0.0
    %550 = vmatpush2.xpose.msra.mxu0 0.0
    %551 = vmatprep.subr.mxu0 0.0
    %552 = vmatpush2.xpose.msra.mxu0 0.0
    %553 = vmatprep.subr.mxu0 0.0
    %554 = vmatpush2.xpose.msra.mxu0 0.0
    %555 = vmatprep.subr.mxu0 0.0
    %556 = vmatpush2.xpose.msra.mxu0 0.0
    %557 = vmatprep.subr.mxu0 0.0
    %558 = vmatpush2.xpose.msra.mxu0 0.0
    %559 = vmatprep.subr.mxu0 0.0
    %560 = vmatpush2.xpose.msra.mxu0 0.0
    %561 = vmatprep.subr.mxu0 0.0
    %562 = vmatpush2.xpose.msra.mxu0 0.0
    %563 = vmatprep.subr.mxu0 0.0
    %564 = vmatpush2.xpose.msra.mxu0 0.0
    %565 = vmatprep.subr.mxu0 0.0
    %566 = vmatpush2.xpose.msra.mxu0 0.0
    %567 = vmatprep.subr.mxu0 0.0
    %568 = vmatpush2.xpose.msra.mxu0 0.0
    %569 = vmatprep.subr.mxu0 0.0
    %570 = vmatpush2.xpose.msra.mxu0 0.0
    %571 = vmatprep.subr.mxu0 0.0
    %572 = vmatpush2.xpose.msra.mxu0 0.0
    %573 = vmatprep.subr.mxu0 0.0
    %574 = vmatpush2.xpose.msra.mxu0 0.0
    %575 = vmatprep.subr.mxu0 0.0
    %576 = vmatpush2.xpose.msra.mxu0 0.0
    %577 = vmatprep.mubr.f32.mxu0 0.0
    %v578 = vand.u32 %v503, 4294901760
    %v579 = vsub.f32 %v503, %v578
    %v580 = vand.u32 %v579, 4294901760
    %v581 = vsub.f32 %v579, %v580
    %v582 = vand.u32 %v581, 4294901760
    %583 = vmatmul.mubr.f32.gmra.mxu0 %v582
    %v584 = vpop.f32.mrf.mxu0
    %v585 = vadd.f32 0.0, %v584
    %v586 = vpop.f32.mrf.mxu0
    %587 = vdwg.mxu0
    %588 = vmatprep.subr.mxu0 0.0
    %589 = vmatpush1.xpose.msra.mxu0 0.0
    %590 = vmatprep.subr.mxu0 0.0
    %591 = vmatpush1.xpose.msra.mxu0 0.0
    %592 = vmatprep.subr.mxu0 0.0
    %593 = vmatpush1.xpose.msra.mxu0 0.0
    %594 = vmatprep.subr.mxu0 0.0
    %595 = vmatpush1.xpose.msra.mxu0 0.0
    %596 = vmatprep.subr.mxu0 0.0
    %597 = vmatpush1.xpose.msra.mxu0 0.0
    %598 = vmatprep.subr.mxu0 0.0
    %599 = vmatpush1.xpose.msra.mxu0 0.0
    %600 = vmatprep.subr.mxu0 0.0
    %601 = vmatpush1.xpose.msra.mxu0 0.0
    %602 = vmatprep.subr.mxu0 0.0
    %603 = vmatpush1.xpose.msra.mxu0 0.0
    %604 = vmatprep.subr.mxu0 0.0
    %605 = vmatpush1.xpose.msra.mxu0 0.0
    %606 = vmatprep.subr.mxu0 0.0
    %607 = vmatpush1.xpose.msra.mxu0 0.0
    %608 = vmatprep.subr.mxu0 0.0
    %609 = vmatpush1.xpose.msra.mxu0 0.0
    %610 = vmatprep.subr.mxu0 0.0
    %611 = vmatpush1.xpose.msra.mxu0 0.0
    %612 = vmatprep.subr.mxu0 0.0
    %613 = vmatpush1.xpose.msra.mxu0 0.0
    %614 = vmatprep.subr.mxu0 0.0
    %615 = vmatpush1.xpose.msra.mxu0 0.0
    %616 = vmatprep.subr.mxu0 0.0
    %v617 = vand.u32 %v509, 4294901760
    %v618 = vsub.f32 %v509, %v617
    %v619 = vand.u32 %v618, 4294901760
    %v620 = vsub.f32 %v618, %v619
    %v621 = vand.u32 %v620, 4294901760
    %622 = vmatpush1.xpose.msra.mxu0 %v621
    %623 = vmatprep.subr.mxu0 0.0
    %v624 = vand.u32 %v506, 4294901760
    %v625 = vsub.f32 %v506, %v624
    %v626 = vand.u32 %v625, 4294901760
    %v627 = vsub.f32 %v625, %v626
    %v628 = vand.u32 %v627, 4294901760
    %629 = vmatpush1.xpose.msra.mxu0 %v628
    %630 = vmatprep.subr.mxu0 0.0
    %631 = vmatpush2.xpose.msra.mxu0 0.0
    %632 = vmatprep.subr.mxu0 0.0
    %633 = vmatpush2.xpose.msra.mxu0 0.0
    %634 = vmatprep.subr.mxu0 0.0
    %635 = vmatpush2.xpose.msra.mxu0 0.0
    %636 = vmatprep.subr.mxu0 0.0
    %637 = vmatpush2.xpose.msra.mxu0 0.0
    %638 = vmatprep.subr.mxu0 0.0
    %639 = vmatpush2.xpose.msra.mxu0 0.0
    %640 = vmatprep.subr.mxu0 0.0
    %641 = vmatpush2.xpose.msra.mxu0 0.0
    %642 = vmatprep.subr.mxu0 0.0
    %643 = vmatpush2.xpose.msra.mxu0 0.0
    %644 = vmatprep.subr.mxu0 0.0
    %645 = vmatpush2.xpose.msra.mxu0 0.0
    %646 = vmatprep.subr.mxu0 0.0
    %647 = vmatpush2.xpose.msra.mxu0 0.0
    %648 = vmatprep.subr.mxu0 0.0
    %649 = vmatpush2.xpose.msra.mxu0 0.0
    %650 = vmatprep.subr.mxu0 0.0
    %651 = vmatpush2.xpose.msra.mxu0 0.0
    %652 = vmatprep.subr.mxu0 0.0
    %653 = vmatpush2.xpose.msra.mxu0 0.0
    %654 = vmatprep.subr.mxu0 0.0
    %655 = vmatpush2.xpose.msra.mxu0 0.0
    %656 = vmatprep.subr.mxu0 0.0
    %657 = vmatpush2.xpose.msra.mxu0 0.0
    %658 = vmatprep.subr.mxu0 0.0
    %659 = vmatpush2.xpose.msra.mxu0 0.0
    %660 = vmatprep.subr.mxu0 0.0
    %661 = vmatpush2.xpose.msra.mxu0 0.0
    %662 = vmatprep.mubr.f32.mxu0 0.0
    %v663 = vand.u32 %v503, 4294901760
    %664 = vmatmul.mubr.f32.gmra.mxu0 %v663
    %v665 = vpop.f32.mrf.mxu0
    %v666 = vadd.f32 %v585, %v665
    %v667 = vpop.f32.mrf.mxu0
    %668 = vdwg.mxu0
    %669 = vmatprep.subr.mxu0 0.0
    %670 = vmatpush1.xpose.msra.mxu0 0.0
    %671 = vmatprep.subr.mxu0 0.0
    %672 = vmatpush1.xpose.msra.mxu0 0.0
    %673 = vmatprep.subr.mxu0 0.0
    %674 = vmatpush1.xpose.msra.mxu0 0.0
    %675 = vmatprep.subr.mxu0 0.0
    %676 = vmatpush1.xpose.msra.mxu0 0.0
    %677 = vmatprep.subr.mxu0 0.0
    %678 = vmatpush1.xpose.msra.mxu0 0.0
    %679 = vmatprep.subr.mxu0 0.0
    %680 = vmatpush1.xpose.msra.mxu0 0.0
    %681 = vmatprep.subr.mxu0 0.0
    %682 = vmatpush1.xpose.msra.mxu0 0.0
    %683 = vmatprep.subr.mxu0 0.0
    %684 = vmatpush1.xpose.msra.mxu0 0.0
    %685 = vmatprep.subr.mxu0 0.0
    %686 = vmatpush1.xpose.msra.mxu0 0.0
    %687 = vmatprep.subr.mxu0 0.0
    %688 = vmatpush1.xpose.msra.mxu0 0.0
    %689 = vmatprep.subr.mxu0 0.0
    %690 = vmatpush1.xpose.msra.mxu0 0.0
    %691 = vmatprep.subr.mxu0 0.0
    %692 = vmatpush1.xpose.msra.mxu0 0.0
    %693 = vmatprep.subr.mxu0 0.0
    %694 = vmatpush1.xpose.msra.mxu0 0.0
    %695 = vmatprep.subr.mxu0 0.0
    %696 = vmatpush1.xpose.msra.mxu0 0.0
    %697 = vmatprep.subr.mxu0 0.0
    %v698 = vand.u32 %v509, 4294901760
    %v699 = vsub.f32 %v509, %v698
    %700 = vmatpush1.xpose.msra.mxu0 %v699
    %701 = vmatprep.subr.mxu0 0.0
    %v702 = vand.u32 %v506, 4294901760
    %v703 = vsub.f32 %v506, %v702
    %704 = vmatpush1.xpose.msra.mxu0 %v703
    %705 = vmatprep.subr.mxu0 0.0
    %706 = vmatpush2.xpose.msra.mxu0 0.0
    %707 = vmatprep.subr.mxu0 0.0
    %708 = vmatpush2.xpose.msra.mxu0 0.0
    %709 = vmatprep.subr.mxu0 0.0
    %710 = vmatpush2.xpose.msra.mxu0 0.0
    %711 = vmatprep.subr.mxu0 0.0
    %712 = vmatpush2.xpose.msra.mxu0 0.0
    %713 = vmatprep.subr.mxu0 0.0
    %714 = vmatpush2.xpose.msra.mxu0 0.0
    %715 = vmatprep.subr.mxu0 0.0
    %716 = vmatpush2.xpose.msra.mxu0 0.0
    %717 = vmatprep.subr.mxu0 0.0
    %718 = vmatpush2.xpose.msra.mxu0 0.0
    %719 = vmatprep.subr.mxu0 0.0
    %720 = vmatpush2.xpose.msra.mxu0 0.0
    %721 = vmatprep.subr.mxu0 0.0
    %722 = vmatpush2.xpose.msra.mxu0 0.0
    %723 = vmatprep.subr.mxu0 0.0
    %724 = vmatpush2.xpose.msra.mxu0 0.0
    %725 = vmatprep.subr.mxu0 0.0
    %726 = vmatpush2.xpose.msra.mxu0 0.0
    %727 = vmatprep.subr.mxu0 0.0
    %728 = vmatpush2.xpose.msra.mxu0 0.0
    %729 = vmatprep.subr.mxu0 0.0
    %730 = vmatpush2.xpose.msra.mxu0 0.0
    %731 = vmatprep.subr.mxu0 0.0
    %732 = vmatpush2.xpose.msra.mxu0 0.0
    %733 = vmatprep.subr.mxu0 0.0
    %734 = vmatpush2.xpose.msra.mxu0 0.0
    %735 = vmatprep.subr.mxu0 0.0
    %736 = vmatpush2.xpose.msra.mxu0 0.0
    %737 = vmatprep.mubr.f32.mxu0 0.0
    %v738 = vand.u32 %v503, 4294901760
    %v739 = vsub.f32 %v503, %v738
    %740 = vmatmul.mubr.f32.gmra.mxu0 %v739
    %v741 = vpop.f32.mrf.mxu0
    %v742 = vadd.f32 %v666, %v741
    %v743 = vpop.f32.mrf.mxu0
    %744 = vdwg.mxu0
    %745 = vmatprep.subr.mxu0 0.0
    %746 = vmatpush1.xpose.msra.mxu0 0.0
    %747 = vmatprep.subr.mxu0 0.0
    %748 = vmatpush1.xpose.msra.mxu0 0.0
    %749 = vmatprep.subr.mxu0 0.0
    %750 = vmatpush1.xpose.msra.mxu0 0.0
    %751 = vmatprep.subr.mxu0 0.0
    %752 = vmatpush1.xpose.msra.mxu0 0.0
    %753 = vmatprep.subr.mxu0 0.0
    %754 = vmatpush1.xpose.msra.mxu0 0.0
    %755 = vmatprep.subr.mxu0 0.0
    %756 = vmatpush1.xpose.msra.mxu0 0.0
    %757 = vmatprep.subr.mxu0 0.0
    %758 = vmatpush1.xpose.msra.mxu0 0.0
    %759 = vmatprep.subr.mxu0 0.0
    %760 = vmatpush1.xpose.msra.mxu0 0.0
    %761 = vmatprep.subr.mxu0 0.0
    %762 = vmatpush1.xpose.msra.mxu0 0.0
    %763 = vmatprep.subr.mxu0 0.0
    %764 = vmatpush1.xpose.msra.mxu0 0.0
    %765 = vmatprep.subr.mxu0 0.0
    %766 = vmatpush1.xpose.msra.mxu0 0.0
    %767 = vmatprep.subr.mxu0 0.0
    %768 = vmatpush1.xpose.msra.mxu0 0.0
    %769 = vmatprep.subr.mxu0 0.0
    %770 = vmatpush1.xpose.msra.mxu0 0.0
    %771 = vmatprep.subr.mxu0 0.0
    %772 = vmatpush1.xpose.msra.mxu0 0.0
    %773 = vmatprep.subr.mxu0 0.0
    %v774 = vand.u32 %v509, 4294901760
    %775 = vmatpush1.xpose.msra.mxu0 %v774
    %776 = vmatprep.subr.mxu0 0.0
    %v777 = vand.u32 %v506, 4294901760
    %778 = vmatpush1.xpose.msra.mxu0 %v777
    %779 = vmatprep.subr.mxu0 0.0
    %780 = vmatpush2.xpose.msra.mxu0 0.0
    %781 = vmatprep.subr.mxu0 0.0
    %782 = vmatpush2.xpose.msra.mxu0 0.0
    %783 = vmatprep.subr.mxu0 0.0
    %784 = vmatpush2.xpose.msra.mxu0 0.0
    %785 = vmatprep.subr.mxu0 0.0
    %786 = vmatpush2.xpose.msra.mxu0 0.0
    %787 = vmatprep.subr.mxu0 0.0
    %788 = vmatpush2.xpose.msra.mxu0 0.0
    %789 = vmatprep.subr.mxu0 0.0
    %790 = vmatpush2.xpose.msra.mxu0 0.0
    %791 = vmatprep.subr.mxu0 0.0
    %792 = vmatpush2.xpose.msra.mxu0 0.0
    %793 = vmatprep.subr.mxu0 0.0
    %794 = vmatpush2.xpose.msra.mxu0 0.0
    %795 = vmatprep.subr.mxu0 0.0
    %796 = vmatpush2.xpose.msra.mxu0 0.0
    %797 = vmatprep.subr.mxu0 0.0
    %798 = vmatpush2.xpose.msra.mxu0 0.0
    %799 = vmatprep.subr.mxu0 0.0
    %800 = vmatpush2.xpose.msra.mxu0 0.0
    %801 = vmatprep.subr.mxu0 0.0
    %802 = vmatpush2.xpose.msra.mxu0 0.0
    %803 = vmatprep.subr.mxu0 0.0
    %804 = vmatpush2.xpose.msra.mxu0 0.0
    %805 = vmatprep.subr.mxu0 0.0
    %806 = vmatpush2.xpose.msra.mxu0 0.0
    %807 = vmatprep.subr.mxu0 0.0
    %808 = vmatpush2.xpose.msra.mxu0 0.0
    %809 = vmatprep.subr.mxu0 0.0
    %810 = vmatpush2.xpose.msra.mxu0 0.0
    %811 = vmatprep.mubr.f32.mxu0 0.0
    %v812 = vand.u32 %v503, 4294901760
    %v813 = vsub.f32 %v503, %v812
    %v814 = vand.u32 %v813, 4294901760
    %815 = vmatmul.mubr.f32.gmra.mxu0 %v814
    %v816 = vpop.f32.mrf.mxu0
    %v817 = vadd.f32 %v742, %v816
    %v818 = vpop.f32.mrf.mxu0
    %819 = vdwg.mxu0
    %820 = vmatprep.subr.mxu0 0.0
    %821 = vmatpush1.xpose.msra.mxu0 0.0
    %822 = vmatprep.subr.mxu0 0.0
    %823 = vmatpush1.xpose.msra.mxu0 0.0
    %824 = vmatprep.subr.mxu0 0.0
    %825 = vmatpush1.xpose.msra.mxu0 0.0
    %826 = vmatprep.subr.mxu0 0.0
    %827 = vmatpush1.xpose.msra.mxu0 0.0
    %828 = vmatprep.subr.mxu0 0.0
    %829 = vmatpush1.xpose.msra.mxu0 0.0
    %830 = vmatprep.subr.mxu0 0.0
    %831 = vmatpush1.xpose.msra.mxu0 0.0
    %832 = vmatprep.subr.mxu0 0.0
    %833 = vmatpush1.xpose.msra.mxu0 0.0
    %834 = vmatprep.subr.mxu0 0.0
    %835 = vmatpush1.xpose.msra.mxu0 0.0
    %836 = vmatprep.subr.mxu0 0.0
    %837 = vmatpush1.xpose.msra.mxu0 0.0
    %838 = vmatprep.subr.mxu0 0.0
    %839 = vmatpush1.xpose.msra.mxu0 0.0
    %840 = vmatprep.subr.mxu0 0.0
    %841 = vmatpush1.xpose.msra.mxu0 0.0
    %842 = vmatprep.subr.mxu0 0.0
    %843 = vmatpush1.xpose.msra.mxu0 0.0
    %844 = vmatprep.subr.mxu0 0.0
    %845 = vmatpush1.xpose.msra.mxu0 0.0
    %846 = vmatprep.subr.mxu0 0.0
    %847 = vmatpush1.xpose.msra.mxu0 0.0
    %848 = vmatprep.subr.mxu0 0.0
    %v849 = vand.u32 %v509, 4294901760
    %v850 = vsub.f32 %v509, %v849
    %v851 = vand.u32 %v850, 4294901760
    %852 = vmatpush1.xpose.msra.mxu0 %v851
    %853 = vmatprep.subr.mxu0 0.0
    %v854 = vand.u32 %v506, 4294901760
    %v855 = vsub.f32 %v506, %v854
    %v856 = vand.u32 %v855, 4294901760
    %857 = vmatpush1.xpose.msra.mxu0 %v856
    %858 = vmatprep.subr.mxu0 0.0
    %859 = vmatpush2.xpose.msra.mxu0 0.0
    %860 = vmatprep.subr.mxu0 0.0
    %861 = vmatpush2.xpose.msra.mxu0 0.0
    %862 = vmatprep.subr.mxu0 0.0
    %863 = vmatpush2.xpose.msra.mxu0 0.0
    %864 = vmatprep.subr.mxu0 0.0
    %865 = vmatpush2.xpose.msra.mxu0 0.0
    %866 = vmatprep.subr.mxu0 0.0
    %867 = vmatpush2.xpose.msra.mxu0 0.0
    %868 = vmatprep.subr.mxu0 0.0
    %869 = vmatpush2.xpose.msra.mxu0 0.0
    %870 = vmatprep.subr.mxu0 0.0
    %871 = vmatpush2.xpose.msra.mxu0 0.0
    %872 = vmatprep.subr.mxu0 0.0
    %873 = vmatpush2.xpose.msra.mxu0 0.0
    %874 = vmatprep.subr.mxu0 0.0
    %875 = vmatpush2.xpose.msra.mxu0 0.0
    %876 = vmatprep.subr.mxu0 0.0
    %877 = vmatpush2.xpose.msra.mxu0 0.0
    %878 = vmatprep.subr.mxu0 0.0
    %879 = vmatpush2.xpose.msra.mxu0 0.0
    %880 = vmatprep.subr.mxu0 0.0
    %881 = vmatpush2.xpose.msra.mxu0 0.0
    %882 = vmatprep.subr.mxu0 0.0
    %883 = vmatpush2.xpose.msra.mxu0 0.0
    %884 = vmatprep.subr.mxu0 0.0
    %885 = vmatpush2.xpose.msra.mxu0 0.0
    %886 = vmatprep.subr.mxu0 0.0
    %887 = vmatpush2.xpose.msra.mxu0 0.0
    %888 = vmatprep.subr.mxu0 0.0
    %889 = vmatpush2.xpose.msra.mxu0 0.0
    %890 = vmatprep.mubr.f32.mxu0 0.0
    %v891 = vand.u32 %v503, 4294901760
    %892 = vmatmul.mubr.f32.gmra.mxu0 %v891
    %v893 = vpop.f32.mrf.mxu0
    %v894 = vadd.f32 %v817, %v893
    %v895 = vpop.f32.mrf.mxu0
    %896 = vdwg.mxu0
    %897 = vmatprep.subr.mxu0 0.0
    %898 = vmatpush1.xpose.msra.mxu0 0.0
    %899 = vmatprep.subr.mxu0 0.0
    %900 = vmatpush1.xpose.msra.mxu0 0.0
    %901 = vmatprep.subr.mxu0 0.0
    %902 = vmatpush1.xpose.msra.mxu0 0.0
    %903 = vmatprep.subr.mxu0 0.0
    %904 = vmatpush1.xpose.msra.mxu0 0.0
    %905 = vmatprep.subr.mxu0 0.0
    %906 = vmatpush1.xpose.msra.mxu0 0.0
    %907 = vmatprep.subr.mxu0 0.0
    %908 = vmatpush1.xpose.msra.mxu0 0.0
    %909 = vmatprep.subr.mxu0 0.0
    %910 = vmatpush1.xpose.msra.mxu0 0.0
    %911 = vmatprep.subr.mxu0 0.0
    %912 = vmatpush1.xpose.msra.mxu0 0.0
    %913 = vmatprep.subr.mxu0 0.0
    %914 = vmatpush1.xpose.msra.mxu0 0.0
    %915 = vmatprep.subr.mxu0 0.0
    %916 = vmatpush1.xpose.msra.mxu0 0.0
    %917 = vmatprep.subr.mxu0 0.0
    %918 = vmatpush1.xpose.msra.mxu0 0.0
    %919 = vmatprep.subr.mxu0 0.0
    %920 = vmatpush1.xpose.msra.mxu0 0.0
    %921 = vmatprep.subr.mxu0 0.0
    %922 = vmatpush1.xpose.msra.mxu0 0.0
    %923 = vmatprep.subr.mxu0 0.0
    %924 = vmatpush1.xpose.msra.mxu0 0.0
    %925 = vmatprep.subr.mxu0 0.0
    %v926 = vand.u32 %v509, 4294901760
    %927 = vmatpush1.xpose.msra.mxu0 %v926
    %928 = vmatprep.subr.mxu0 0.0
    %v929 = vand.u32 %v506, 4294901760
    %930 = vmatpush1.xpose.msra.mxu0 %v929
    %931 = vmatprep.subr.mxu0 0.0
    %932 = vmatpush2.xpose.msra.mxu0 0.0
    %933 = vmatprep.subr.mxu0 0.0
    %934 = vmatpush2.xpose.msra.mxu0 0.0
    %935 = vmatprep.subr.mxu0 0.0
    %936 = vmatpush2.xpose.msra.mxu0 0.0
    %937 = vmatprep.subr.mxu0 0.0
    %938 = vmatpush2.xpose.msra.mxu0 0.0
    %939 = vmatprep.subr.mxu0 0.0
    %940 = vmatpush2.xpose.msra.mxu0 0.0
    %941 = vmatprep.subr.mxu0 0.0
    %942 = vmatpush2.xpose.msra.mxu0 0.0
    %943 = vmatprep.subr.mxu0 0.0
    %944 = vmatpush2.xpose.msra.mxu0 0.0
    %945 = vmatprep.subr.mxu0 0.0
    %946 = vmatpush2.xpose.msra.mxu0 0.0
    %947 = vmatprep.subr.mxu0 0.0
    %948 = vmatpush2.xpose.msra.mxu0 0.0
    %949 = vmatprep.subr.mxu0 0.0
    %950 = vmatpush2.xpose.msra.mxu0 0.0
    %951 = vmatprep.subr.mxu0 0.0
    %952 = vmatpush2.xpose.msra.mxu0 0.0
    %953 = vmatprep.subr.mxu0 0.0
    %954 = vmatpush2.xpose.msra.mxu0 0.0
    %955 = vmatprep.subr.mxu0 0.0
    %956 = vmatpush2.xpose.msra.mxu0 0.0
    %957 = vmatprep.subr.mxu0 0.0
    %958 = vmatpush2.xpose.msra.mxu0 0.0
    %959 = vmatprep.subr.mxu0 0.0
    %960 = vmatpush2.xpose.msra.mxu0 0.0
    %961 = vmatprep.subr.mxu0 0.0
    %962 = vmatpush2.xpose.msra.mxu0 0.0
    %963 = vmatprep.mubr.f32.mxu0 0.0
    %v964 = vand.u32 %v503, 4294901760
    %965 = vmatmul.mubr.f32.gmra.mxu0 %v964
    %v966 = vpop.f32.mrf.mxu0
    %v967 = vadd.f32 %v894, %v966
    %v968 = vpop.f32.mrf.mxu0
    %969 = vdwg.mxu0
    %v970 = vld [vmem:[%s2] sm:$0xff]
    %972 = vset.pattern.permute.xlu0 0
    %973 = vperm.xlu0 %972, %v970
    %v974 = vpop.permute.xlu0 %973
    %v976 = vlaneseq
    %v977 = vshrl.u32 %v976, 7
    %v978 = vsub.s32 0, %v977
    %v979 = vrot.slane %v967, %v978
    %v980 = vadd.f32 %v974, %v979
    %v981 = vmul.f32 %v497, 2.0
    %v982 = vsub.f32 %v980, %v981
    %v983 = vmax.f32 %v982, 0.0
    %vm984 = vcmask 130048
    %985 = vst.msk [vmem:[%s3] sm:$0xff] %vm984, %v983
    // Predicated region
    $region18: #{kmean_cluster_forward.1} parent=1 // pred_check
      _
    $region19: #{kmean_cluster_forward.1} parent=1 // pred_check_branch
      %987 = sbr.rel (0) target = $region21
    $region20: #{kmean_cluster_forward.1} parent=1 // pred_region
      _
    $region21: #{kmean_cluster_forward.1} parent=1 // pred_fallthru
      _
    // Predicated region
    $region22: #{kmean_cluster_forward.1} parent=1 // pred_check
      _
    $region23: #{kmean_cluster_forward.1} parent=1 // pred_check_branch
      %989 = sbr.rel (0) target = $region25
    $region24: #{kmean_cluster_forward.1} parent=1 // pred_region
      _
    $region25: #{kmean_cluster_forward.1} parent=1 // pred_fallthru
      _
    %990 = vsyncpa [#allocation3], 1

</llo_original>
